<compile_context>
chip_gen: v6e
topology: v6e:2x2x1
jax: 0.10.0
libtpu: 0.0.40
codegen_flags: <defaults>
</compile_context>

<pallas_src>
import functools

import jax
import jax.numpy as jnp
from jax import lax
from jax.experimental import pallas as pl
from jax.experimental.pallas import tpu as pltpu


def _ce_partial_kernel(logits_ref, tgt_ref, out_ref, m_ref, l_ref, *,
                       n_total, tile_n):
    """Online-logsumexp CE over one (batch tile, class tile) grid cell.

    Grid is (n_tiles, c_tiles); the C axis is the reduction axis (last,
    "arbitrary").  m_ref / l_ref are the running row-max and scaled exp-sum.
    """
    i = pl.program_id(0)
    j = pl.program_id(1)

    @pl.when(j == 0)
    def _():
        m_ref[...] = jnp.full(m_ref.shape, -jnp.inf, dtype=jnp.float32)
        l_ref[...] = jnp.zeros(l_ref.shape, dtype=jnp.float32)

    logits = logits_ref[...].astype(jnp.float32)            # (tile_n, tile_c)
    blk_max = jnp.max(logits, axis=-1, keepdims=True)       # (tile_n, 1)
    m_prev = m_ref[...]
    m_new = jnp.maximum(m_prev, blk_max)
    l_ref[...] = (l_ref[...] * jnp.exp(m_prev - m_new)
                  + jnp.sum(jnp.exp(logits - m_new), axis=-1, keepdims=True))
    m_ref[...] = m_new

    @pl.when(j == pl.num_programs(1) - 1)
    def _():
        lse = m_ref[...] + jnp.log(l_ref[...])               # (tile_n, 1)
        # Target logit was gathered (O(N)) on the wrapper side; no per-element
        # iota/cmp/select pass in the kernel.
        nll = lse - tgt_ref[...]                             # (tile_n, 1)

        # Mask rows past the true batch size (ragged last tile).  Keep the
        # mask as a select on nll so garbage (NaN/Inf) in padded rows cannot
        # propagate; divide by the GLOBAL N outside the kernel.
        row = lax.broadcasted_iota(jnp.int32, nll.shape, 0) + i * tile_n
        nll = jnp.where(row < n_total, nll, 0.0)

        # Lane-dense per-tile partial sum: full (1, 8, 128) splat -> unmasked vst.
        out_ref[...] = jnp.full((1, 8, 128), jnp.sum(nll), dtype=jnp.float32)


def _vmem_capacity_bytes():
    """Physical VMEM per TensorCore; conservative fallback = v7x (64 MiB)."""
    try:
        return int(pltpu.get_tpu_info().vmem_capacity_bytes)
    except Exception:
        return 64 * 1024 * 1024


def _pick_tiles(n, c, itemsize, work_budget_bytes):
    """Choose (tile_n, tile_c) so the f32 working set fits the budget.

    Working set per grid step ~= double-buffered native-dtype input tile plus
    ~3 f32 (tile_n, tile_c) temporaries (upcast, exp, shifted).
    """
    per_elem = 2 * itemsize + 12
    row_align = max(8, 32 // itemsize)          # f32: 8, bf16: 16, int8/fp8: 32
    tile_c = c
    rows = work_budget_bytes // max(1, tile_c * per_elem)
    if rows < 4 * row_align and c > 4096:
        # LLM-vocab regime: tile C (online logsumexp) with the largest
        # lane-aligned divisor of C so batch tiles stay big enough to amortize
        # the ~0.35us/step overhead and both v7x TCs get work.
        for cand in (4096, 2048, 1024, 512, 256, 128):
            if c % cand == 0:
                tile_c = cand
                break
        rows = work_budget_bytes // max(1, tile_c * per_elem)
    rows = max(row_align, (rows // row_align) * row_align)
    rows = min(rows, 4096)
    tile_n = n if n <= rows else rows
    return tile_n, tile_c


def cross_entropy_pallas(logits, targets, *, tile_n=None, tile_c=None):
    """Mean cross entropy over the batch (mirrors torch.nn.CrossEntropyLoss)."""
    n, c = logits.shape
    itemsize = jnp.dtype(logits.dtype).itemsize

    vmem_cap = _vmem_capacity_bytes()
    vmem_limit = min(vmem_cap // 2, 64 * 1024 * 1024)      # 64 MiB v5e/v6e, 32 MiB v7x
    auto_tile_n, auto_tile_c = _pick_tiles(n, c, itemsize, vmem_cap // 8)
    if tile_n is None:
        tile_n = auto_tile_n
    if tile_c is None:
        tile_c = auto_tile_c
    tile_n = min(tile_n, n)
    if c % tile_c != 0:
        tile_c = c                                          # fall back to full-C blocks
    num_n_tiles = pl.cdiv(n, tile_n)
    num_c_tiles = c // tile_c

    # O(N) wrapper-side gather of the target logit; only the gathered (N, 1)
    # column is upcast, the [N, C] logits stream through the kernel in their
    # native dtype.  NOTE: out-of-range targets clamp instead of erroring
    # (torch raises); acceptable for the forward-pass port.
    tgt_logits = jnp.take_along_axis(
        logits, targets.reshape(n, 1).astype(jnp.int32), axis=1
    ).astype(jnp.float32)

    kernel = functools.partial(_ce_partial_kernel, n_total=n, tile_n=tile_n)

    partials = pl.pallas_call(
        kernel,
        out_shape=jax.ShapeDtypeStruct((num_n_tiles, 8, 128), jnp.float32),
        grid=(num_n_tiles, num_c_tiles),
        in_specs=[
            pl.BlockSpec((tile_n, tile_c), lambda i, j: (i, j)),  # logits tile
            pl.BlockSpec((tile_n, 1), lambda i, j: (i, 0)),        # target logits
        ],
        out_specs=pl.BlockSpec((1, 8, 128), lambda i, j: (i, 0, 0)),
        scratch_shapes=[
            pltpu.VMEM((tile_n, 1), jnp.float32),   # running row max
            pltpu.VMEM((tile_n, 1), jnp.float32),   # running scaled exp-sum
        ],
        compiler_params=pltpu.CompilerParams(
            dimension_semantics=("parallel", "arbitrary"),
            vmem_limit_bytes=vmem_limit,
        ),
    )(logits, tgt_logits)

    # Finish the 'mean' reduction in JAX: sum of per-tile partial sums / global N.
    return jnp.sum(partials[:, 0, 0]) / jnp.float32(n)


class NoisyCrossEntropyLoss:
    """JAX/Pallas port of the PyTorch NoisyCrossEntropyLoss forward pass."""

    def __init__(self, noise_prob=0.1, training=False):
        self.noise_prob = noise_prob
        self.training = training

    def __call__(self, outputs, targets, key=None):
        if self.training and key is not None:
            # Fully traced noise injection (no host-side float()/item() sync).
            # Same double gating as the torch module: a batch-level
            # Bernoulli(noise_prob) chooses the noisy branch, and inside it
            # each label is replaced by a uniform random class with
            # probability noise_prob.
            k_branch, k_mask, k_labels = jax.random.split(key, 3)
            num_classes = outputs.shape[1]
            take_noisy_branch = jax.random.uniform(k_branch, ()) < self.noise_prob
            noise_mask = jax.random.uniform(k_mask, targets.shape) < self.noise_prob
            random_labels = jax.random.randint(
                k_labels, targets.shape, 0, num_classes, dtype=targets.dtype)
            targets = jnp.where(jnp.logical_and(take_noisy_branch, noise_mask),
                                random_labels, targets)
        return cross_entropy_pallas(outputs, targets)


if __name__ == "__main__":
    # NOTE: at demo scale the call is fixed-overhead bound; the tiling/dtype
    # work above targets production-sized N, C.
    N, C = 8, 32
    key = jax.random.PRNGKey(0)
    k_logits, k_targets = jax.random.split(key)
    logits_f32 = jax.random.normal(k_logits, (N, C), dtype=jnp.float32)
    targets = jax.random.randint(k_targets, (N,), 0, C, dtype=jnp.int32)

    # Eval path (matches torch.nn.CrossEntropyLoss, mean reduction).
    loss_fn = NoisyCrossEntropyLoss(noise_prob=0.1, training=False)
    loss = jax.block_until_ready(loss_fn(logits_f32, targets))
    ref = jnp.mean(jax.nn.logsumexp(logits_f32, axis=-1)
                   - logits_f32[jnp.arange(N), targets])
    assert jnp.allclose(loss, ref, atol=1e-5, rtol=1e-5), (loss, ref)

    # Native bf16 logits: no wrapper-side f32 copy of [N, C]; upcast in-kernel.
    logits_bf16 = logits_f32.astype(jnp.bfloat16)
    loss_bf16 = jax.block_until_ready(loss_fn(logits_bf16, targets))
    lb32 = logits_bf16.astype(jnp.float32)
    ref_bf16 = jnp.mean(jax.nn.logsumexp(lb32, axis=-1)
                        - lb32[jnp.arange(N), targets])
    assert jnp.allclose(loss_bf16, ref_bf16, atol=1e-4, rtol=1e-4), (loss_bf16, ref_bf16)

    # Multi-tile + ragged-last-tile batch path (2 tiles of 8 rows over N=12).
    N2 = 12
    k2a, k2b = jax.random.split(jax.random.PRNGKey(2))
    logits2 = jax.random.normal(k2a, (N2, C), dtype=jnp.float32)
    targets2 = jax.random.randint(k2b, (N2,), 0, C, dtype=jnp.int32)
    loss2 = jax.block_until_ready(
        cross_entropy_pallas(logits2, targets2, tile_n=8))
    ref2 = jnp.mean(jax.nn.logsumexp(logits2, axis=-1)
                    - logits2[jnp.arange(N2), targets2])
    assert jnp.allclose(loss2, ref2, atol=1e-5, rtol=1e-5), (loss2, ref2)

    # C-tiled online-logsumexp path (grid (2, 2): N=16 / tile_n=8, C=256 / tile_c=128).
    N3, C3 = 16, 256
    k3a, k3b = jax.random.split(jax.random.PRNGKey(3))
    logits3 = jax.random.normal(k3a, (N3, C3), dtype=jnp.float32)
    targets3 = jax.random.randint(k3b, (N3,), 0, C3, dtype=jnp.int32)
    loss3 = jax.block_until_ready(
        cross_entropy_pallas(logits3, targets3, tile_n=8, tile_c=128))
    ref3 = jnp.mean(jax.nn.logsumexp(logits3, axis=-1)
                    - logits3[jnp.arange(N3), targets3])
    assert jnp.allclose(loss3, ref3, atol=1e-5, rtol=1e-5), (loss3, ref3)

    # Training path is fully traced (jittable), no host sync.
    train_fn = NoisyCrossEntropyLoss(noise_prob=0.1, training=True)
    train_loss = jax.jit(lambda o, t, k: train_fn(o, t, key=k))(
        logits_f32, targets, jax.random.PRNGKey(1))
    jax.block_until_ready(train_loss)

    print("KERNEL_OK")
</pallas_src>

<mosaic_0001>
module attributes {stable_mosaic.version = 11 : i64} {
  func.func @_ce_partial_kernel(%arg0: i32, %arg1: i32, %arg2: memref<8x32xf32, #tpu.memory_space<vmem>>, %arg3: memref<8x1xf32, #tpu.memory_space<vmem>>, %arg4: memref<1x8x128xf32, #tpu.memory_space<vmem>>, %arg5: memref<8x1xf32, #tpu.memory_space<vmem>>, %arg6: memref<8x1xf32, #tpu.memory_space<vmem>>) attributes {dimension_semantics = [#tpu.dimension_semantics<parallel>, #tpu.dimension_semantics<arbitrary>], iteration_bounds = array<i64: 1, 1>, scalar_prefetch = 0 : i64, scratch_operands = 2 : i64, tpu.core_type = #tpu.core_type<tc>, window_params = [{transform_indices = @transform_0, window_bounds = array<i64: 8, 32>}, {transform_indices = @transform_1, window_bounds = array<i64: 8, 1>}, {transform_indices = @transform_2, window_bounds = array<i64: 1, 8, 128>}]} {
    %c0_i32 = arith.constant 0 : i32
    %0 = arith.cmpi eq, %arg1, %c0_i32 : i32
    %1 = arith.extui %0 : i1 to i32
    %c0_i32_0 = arith.constant 0 : i32
    %2 = arith.cmpi ne, %1, %c0_i32_0 : i32
    scf.if %2 {
      %cst_13 = arith.constant 0xFF800000 : f32
      %23 = vector.broadcast %cst_13 : f32 to vector<8x1xf32>
      %c0_14 = arith.constant 0 : index
      %c0_15 = arith.constant 0 : index
      %24 = vector.load %arg5[%c0_14, %c0_15] : memref<8x1xf32, #tpu.memory_space<vmem>>, vector<8x1xf32>
      tpu.vector_store %arg5[%c0_14, %c0_15], %23 {strides = array<i32>} : memref<8x1xf32, #tpu.memory_space<vmem>>, vector<8x1xf32>,
      %cst_16 = arith.constant 0.000000e+00 : f32
      %25 = vector.broadcast %cst_16 : f32 to vector<8x1xf32>
      %c0_17 = arith.constant 0 : index
      %c0_18 = arith.constant 0 : index
      %26 = vector.load %arg6[%c0_17, %c0_18] : memref<8x1xf32, #tpu.memory_space<vmem>>, vector<8x1xf32>
      tpu.vector_store %arg6[%c0_17, %c0_18], %25 {strides = array<i32>} : memref<8x1xf32, #tpu.memory_space<vmem>>, vector<8x1xf32>,
    } else {
    }
    %c0 = arith.constant 0 : index
    %c0_1 = arith.constant 0 : index
    %3 = vector.load %arg2[%c0, %c0_1] : memref<8x32xf32, #tpu.memory_space<vmem>>, vector<8x32xf32>
    %cst = arith.constant dense<0xFF800000> : vector<8xf32>
    %4 = vector.multi_reduction <maximumf>, %3, %cst [1] : vector<8x32xf32> to vector<8xf32>
    %5 = vector.shape_cast %4 : vector<8xf32> to vector<8x1xf32>
    %c0_2 = arith.constant 0 : index
    %c0_3 = arith.constant 0 : index
    %6 = vector.load %arg5[%c0_2, %c0_3] : memref<8x1xf32, #tpu.memory_space<vmem>>, vector<8x1xf32>
    %7 = arith.maximumf %6, %5 : vector<8x1xf32>
    %c0_4 = arith.constant 0 : index
    %c0_5 = arith.constant 0 : index
    %8 = vector.load %arg6[%c0_4, %c0_5] : memref<8x1xf32, #tpu.memory_space<vmem>>, vector<8x1xf32>
    %9 = arith.subf %6, %7 : vector<8x1xf32>
    %10 = math.exp %9 : vector<8x1xf32>
    %11 = arith.mulf %8, %10 : vector<8x1xf32>
    %12 = vector.broadcast %7 : vector<8x1xf32> to vector<8x32xf32>
    %13 = arith.subf %3, %12 : vector<8x32xf32>
    %14 = math.exp %13 : vector<8x32xf32>
    %cst_6 = arith.constant dense<0.000000e+00> : vector<8xf32>
    %15 = vector.multi_reduction <add>, %14, %cst_6 [1] : vector<8x32xf32> to vector<8xf32>
    %16 = vector.shape_cast %15 : vector<8xf32> to vector<8x1xf32>
    %17 = arith.addf %11, %16 : vector<8x1xf32>
    %c0_7 = arith.constant 0 : index
    %c0_8 = arith.constant 0 : index
    %18 = vector.load %arg6[%c0_7, %c0_8] : memref<8x1xf32, #tpu.memory_space<vmem>>, vector<8x1xf32>
    tpu.vector_store %arg6[%c0_7, %c0_8], %17 {strides = array<i32>} : memref<8x1xf32, #tpu.memory_space<vmem>>, vector<8x1xf32>,
    %c0_9 = arith.constant 0 : index
    %c0_10 = arith.constant 0 : index
    %19 = vector.load %arg5[%c0_9, %c0_10] : memref<8x1xf32, #tpu.memory_space<vmem>>, vector<8x1xf32>
    tpu.vector_store %arg5[%c0_9, %c0_10], %7 {strides = array<i32>} : memref<8x1xf32, #tpu.memory_space<vmem>>, vector<8x1xf32>,
    %c0_i32_11 = arith.constant 0 : i32
    %20 = arith.cmpi eq, %arg1, %c0_i32_11 : i32
    %21 = arith.extui %20 : i1 to i32
    %c0_i32_12 = arith.constant 0 : i32
    %22 = arith.cmpi ne, %21, %c0_i32_12 : i32
    scf.if %22 {
      %c0_13 = arith.constant 0 : index
      %c0_14 = arith.constant 0 : index
      %23 = vector.load %arg5[%c0_13, %c0_14] : memref<8x1xf32, #tpu.memory_space<vmem>>, vector<8x1xf32>
      %c0_15 = arith.constant 0 : index
      %c0_16 = arith.constant 0 : index
      %24 = vector.load %arg6[%c0_15, %c0_16] : memref<8x1xf32, #tpu.memory_space<vmem>>, vector<8x1xf32>
      %25 = math.log %24 : vector<8x1xf32>
      %26 = arith.addf %23, %25 : vector<8x1xf32>
      %c0_17 = arith.constant 0 : index
      %c0_18 = arith.constant 0 : index
      %27 = vector.load %arg3[%c0_17, %c0_18] : memref<8x1xf32, #tpu.memory_space<vmem>>, vector<8x1xf32>
      %28 = arith.subf %26, %27 : vector<8x1xf32>
      %29 = tpu.iota {dimensions = array<i32: 0>} : vector<8x1xi32>
      %c8_i32 = arith.constant 8 : i32
      %30 = arith.muli %arg0, %c8_i32 : i32
      %31 = vector.broadcast %30 : i32 to vector<8x1xi32>
      %32 = arith.addi %29, %31 : vector<8x1xi32>
      %c8_i32_19 = arith.constant 8 : i32
      %33 = vector.broadcast %c8_i32_19 : i32 to vector<8x1xi32>
      %34 = arith.cmpi slt, %32, %33 : vector<8x1xi32>
      %cst_20 = arith.constant 0.000000e+00 : f32
      %35 = vector.broadcast %cst_20 : f32 to vector<8x1xf32>
      %36 = arith.select %34, %28, %35 : vector<8x1xi1>, vector<8x1xf32>
      %37 = vector.shape_cast %36 : vector<8x1xf32> to vector<1x8x1xf32>
      %cst_21 = arith.constant dense<0.000000e+00> : vector<1xf32>
      %38 = vector.multi_reduction <add>, %37, %cst_21 [1, 2] : vector<1x8x1xf32> to vector<1xf32>
      %39 = vector.shape_cast %38 : vector<1xf32> to vector<1x1x1xf32>
      %40 = vector.extract %39[0, 0, 0] : f32 from vector<1x1x1xf32>
      %41 = vector.broadcast %40 : f32 to vector<1x8x128xf32>
      %c0_22 = arith.constant 0 : index
      %c0_23 = arith.constant 0 : index
      %c0_24 = arith.constant 0 : index
      %42 = vector.load %arg4[%c0_22, %c0_23, %c0_24] : memref<1x8x128xf32, #tpu.memory_space<vmem>>, vector<1x8x128xf32>
      tpu.vector_store %arg4[%c0_22, %c0_23, %c0_24], %41 {strides = array<i32>} : memref<1x8x128xf32, #tpu.memory_space<vmem>>, vector<1x8x128xf32>,
    } else {
    }
    return
  }
  func.func @transform_0(%arg0: i32, %arg1: i32) -> (i32, i32) {
    %c0_i32 = arith.constant 0 : i32
    return %arg0, %arg1 : i32, i32
  }
  func.func @transform_1(%arg0: i32, %arg1: i32) -> (i32, i32) {
    %c0_i32 = arith.constant 0 : i32
    %c0_i32_0 = arith.constant 0 : i32
    return %arg0, %c0_i32 : i32, i32
  }
  func.func @transform_2(%arg0: i32, %arg1: i32) -> (i32, i32, i32) {
    %c0_i32 = arith.constant 0 : i32
    %c0_i32_0 = arith.constant 0 : i32
    %c0_i32_1 = arith.constant 0 : i32
    return %arg0, %c0_i32, %c0_i32_0 : i32, i32, i32
  }
}

</mosaic_0001>

<llo_original>
// kernel: tpu_custom_call.1
$region0: #{tpu_custom_call.1}
  #allocation0 [shape = 'u32[]', space=smem, size = 0x4, offset = 0x4, fixed_abs, tag = 'smem constant byte address 0x4 - core index']
  #allocation1 [shape = 'u32[144,128]{1,0:T(1,128)}', space=vmem, size = 0x12000, scoped, tag = 'internal scratch']
  #allocation2 [shape = 'f32[8,1]{1,0:T(8,128)}', space=vmem, size = 0x1000, scoped, tag = 'scratch operand']
  #allocation3 [shape = 'f32[8,1]{1,0:T(8,128)}', space=vmem, size = 0x1000, scoped, tag = 'scratch operand']
  %s0 = inlined_call_operand.vmem [shape: f32[8,32], index: 0, kind: input, shape index: {}]
  %s1 = inlined_call_operand.vmem [shape: f32[8,1], index: 1, kind: input, shape index: {}]
  %s2 = inlined_call_operand.hbm [shape: f32[1,8,128], index: 2, kind: output, shape index: {}]
  %s3 = sld [smem:[#allocation0]]
  $region26: #{tpu_custom_call.1} parent=0
    _
  %s5 = ssub.s32 1, %s3
  %s6 = scalar_select 0, %s5, %s3
  $region1: #{tpu_custom_call.1} parent=0
    #allocation4 [shape = 'u8[4096]{0}', space=vmem, size = 0x1000, scoped, tag = 'output window, operand 0, single buffered']
    #allocation5 [shape = 's32[1]{0}', space=sflag, size = 0x4, scoped, tag = 'scoped memory for tpu_custom_call.1']
    %7 = vsyncpa [#allocation5], 0
    // Predicated region
    $region2: #{tpu_custom_call.1} parent=1 // pred_check
      _
    $region3: #{tpu_custom_call.1} parent=1 // pred_check_branch
      %9 = sbr.rel (0) target = $region5
    $region4: #{tpu_custom_call.1} parent=1 // pred_region
      _
    $region5: #{tpu_custom_call.1} parent=1 // pred_fallthru
      _
    // Predicated region
    $region6: #{tpu_custom_call.1} parent=1 // pred_check
      _
    $region7: #{tpu_custom_call.1} parent=1 // pred_check_branch
      %11 = sbr.rel (0) target = $region9
    $region8: #{tpu_custom_call.1} parent=1 // pred_region
      _
    $region9: #{tpu_custom_call.1} parent=1 // pred_fallthru
      _
    %p12 = scmp.eq.s32.totalorder 0, 0
    // Predicated region
    $region10: #{tpu_custom_call.1} parent=1 // pred_check
      %p13 = pneg %p12
    $region11: #{tpu_custom_call.1} parent=1 // pred_check_branch
      %15 = sbr.rel (%p13) target = $region13
    $region12: #{tpu_custom_call.1} parent=1 // pred_region
      %vm16 = vcmask 7168
      %17 = vst.msk [vmem:[#allocation2] sm:$0xff] %vm16, -inf
      %18 = vst.msk [vmem:[#allocation3] sm:$0xff] %vm16, 0.0
    $region13: #{tpu_custom_call.1} parent=1 // pred_fallthru
      _
    %v19 = vld [vmem:[%s0] sm:$0xff]
    %vm20 = vcmask 261120
    %v21 = vsel %vm20, %v19, -inf
    %22 = vmax.xlane.f32.xlu0 %v21
    %v23 = vpop.xlane.xlu0 %22
    %v24 = vld [vmem:[#allocation2] sm:$0xff]
    %v25 = vmax.f32 %v24, %v23
    %v26 = vld [vmem:[#allocation3] sm:$0xff]
    %v27 = vsub.f32 %v24, %v25
    %v28 = vmul.f32 %v27, 1.442695
    %v29 = vpow.pop %v28
    %v30 = vmul.f32 %v26, %v29
    %32 = vset.pattern.permute.xlu0 0
    %33 = vperm.xlu0 %32, %v25
    %v34 = vpop.permute.xlu0 %33
    %v36 = vsub.f32 %v19, %v34
    %v37 = vmul.f32 %v36, 1.442695
    %v38 = vpow.pop %v37
    %v39 = vsel %vm20, %v38, 0.0
    %40 = vadd.xlane.f32.xlu0 %v39
    %v41 = vpop.xlane.xlu0 %40
    %v42 = vadd.f32 %v30, %v41
    %vm43 = vcmask 7168
    %44 = vst.msk [vmem:[#allocation3] sm:$0xff] %vm43, %v42
    %45 = vst.msk [vmem:[#allocation2] sm:$0xff] %vm43, %v25
    // Predicated region
    $region14: #{tpu_custom_call.1} parent=1 // pred_check
      %p46 = pneg %p12
    $region15: #{tpu_custom_call.1} parent=1 // pred_check_branch
      %48 = sbr.rel (%p46) target = $region17
    $region16: #{tpu_custom_call.1} parent=1 // pred_region
      %v49 = vld [vmem:[#allocation2] sm:$0xff]
      %v50 = vld [vmem:[#allocation3] sm:$0xff]
      %v51 = vlog2.pop %v50
      %v52 = vmul.f32 %v51, 0.6931472
      %v53 = vadd.f32 %v49, %v52
      %v54 = vld [vmem:[%s1] sm:$0xff]
      %v55 = vsub.f32 %v53, %v54
      %v56 = vlaneseq
      %v57 = vshrl.u32 %v56, 7
      %s58 = smul.u32 0, 8
      %v59 = vstv %s58
      %v60 = vadd.s32 %v57, %v59
      %vm61 = vcmp.lt.s32.totalorder %v60, 8
      %v62 = vsel %vm61, %v55, 0.0
      %v63 = vsel %vm43, %v62, 0.0
      %64 = vadd.xlane.f32.xlu0 %v63
      %v65 = vpop.xlane.xlu0 %64
      %v66 = vrot.slane %v65, 4
      %v67 = vadd.f32 %v65, %v66
      %v68 = vrot.slane %v67, 2
      %v69 = vadd.f32 %v67, %v68
      %v70 = vrot.slane %v69, 1
      %v71 = vadd.f32 %v69, %v70
      %s72 = vtos %v71
      %v73 = vstv %s72
      %74 = vst [vmem:[#allocation4] sm:$0xff] %v73
    $region17: #{tpu_custom_call.1} parent=1 // pred_fallthru
      _
    // Predicated region
    $region18: #{tpu_custom_call.1} parent=1 // pred_check
      _
    $region19: #{tpu_custom_call.1} parent=1 // pred_check_branch
      %76 = sbr.rel (0) target = $region21
    $region20: #{tpu_custom_call.1} parent=1 // pred_region
      %s78 = ssub.s32 128, 128
      %79 = vsyncadd [#allocation5], %s78
      %s81 = sshll.u32 [#allocation4], 4
      %s82 = int_to_ptr.vmem [resolvable:$true] %s81
      %84 = dma.vmem_to_hbm [thread:$0]  %s82, 128, %s2, [#allocation5]
    $region21: #{tpu_custom_call.1} parent=1 // pred_fallthru
      _
    // Predicated region
    $region22: #{tpu_custom_call.1} parent=1 // pred_check
      _
    $region23: #{tpu_custom_call.1} parent=1 // pred_check_branch
      %86 = sbr.rel (0) target = $region25
    $region24: #{tpu_custom_call.1} parent=1 // pred_region
      %87 = dma.done [#allocation5], 128
    $region25: #{tpu_custom_call.1} parent=1 // pred_fallthru
      _
    %88 = vsyncpa [#allocation5], 1

</llo_original>
